<compile_context>
chip_gen: v7x
topology: tpu7x:2x2x1
jax: 0.10.0
libtpu: 0.0.40
codegen_flags: <defaults>
</compile_context>

<pallas_src>
import jax
import jax.numpy as jnp
from jax import lax
from jax.experimental import pallas as pl
from jax.experimental.pallas import tpu as pltpu


def _sim_kernel(eq_ref, ec_ref, out_ref):
    # eq_ref:  [1, H]   pooled question embedding (broadcast over the grid)
    # ec_ref:  [TN, H]  CLS embeddings for this tile of context sentences
    # out_ref: [1, TN]  similarity scores (lane-dense output block)
    out_ref[...] = lax.dot_general(
        eq_ref[...],
        ec_ref[...],
        dimension_numbers=(((1,), (1,)), ((), ())),  # contract H with H
        preferred_element_type=jnp.float32,
    )


def similarity(context_flat, e_q, *, hidden, tile_n=512):
    """sim[1, N] = e_c @ e_q.T  where  e_c = context_flat[:, :hidden].

    context_flat: [N, S*H] row-major view of per-sentence token embeddings;
                  columns [0:H] of each row are that sentence's CLS embedding.
    e_q:          [1, H] pooled question embedding.
    """
    n = context_flat.shape[0]
    h = hidden
    assert e_q.shape == (1, h), e_q.shape

    # Tile N: tn rows of H features double-buffered is tiny vs VMEM even on
    # v7x (64 MiB physical / 32 MiB default scoped).
    tn = n if n <= tile_n else tile_n
    grid = (pl.cdiv(n, tn),)

    itemsize = jnp.dtype(context_flat.dtype).itemsize
    return pl.pallas_call(
        _sim_kernel,
        out_shape=jax.ShapeDtypeStruct((1, n), jnp.float32),
        grid=grid,
        in_specs=[
            # Question embedding: same block every grid step.
            pl.BlockSpec((1, h), lambda i: (0, 0)),
            # CLS columns only: block = rows [i*tn:(i+1)*tn], columns [0:H]
            # of the [N, S*H] view -> strided DMA of token 0 per sentence.
            pl.BlockSpec((tn, h), lambda i: (i, 0)),
        ],
        out_specs=pl.BlockSpec((1, tn), lambda i: (0, i)),
        compiler_params=pltpu.CompilerParams(
            dimension_semantics=("parallel",),
        ),
        cost_estimate=pl.CostEstimate(
            flops=2 * n * h,
            transcendentals=0,
            bytes_accessed=(n * h + h) * itemsize + n * 4,
        ),
    )(e_q, context_flat)


def model_forward(context_token_embeds, question_pooled):
    """Stand-in for Model.forward.

    context_token_embeds: [N, S, H]  simulated retriever(z['input_ids'])[0]
    question_pooled:      [1, H]     simulated qa_model(x)['pooled_output']
    returns:              [1, N]     similarity of each context sentence to q
    """
    # TODO(synk): tokenizer + pretrained transformer encoders (AutoModel /
    # qa_model) have no Pallas equivalent; their outputs are simulated inputs.
    n, s, h = context_token_embeds.shape
    # Free row-major view: CLS (token 0) embedding of sentence i lives in
    # context_flat[i, 0:h]; the kernel's BlockSpec fetches only those columns.
    context_flat = context_token_embeds.reshape(n, s * h)
    # Note: torch's `.squeeze().unsqueeze(0)` behaves differently when N == 1
    # (it would collapse to [1, H]); here we always keep the [1, N] layout.
    return similarity(context_flat, question_pooled, hidden=h)


if __name__ == "__main__":
    key = jax.random.PRNGKey(0)
    k1, k2 = jax.random.split(key)

    # Small toy shapes.  At this size pallas_call overhead dominates the ~2
    # KFLOP of work; the tiling / lane-dense layout pays off once N is large.
    N = 8     # number of context sentences
    S = 16    # tokens per sentence (padded)
    H = 128   # hidden size

    # Deterministic "embeddings" standing in for the pretrained encoders.
    context_token_embeds = jax.random.normal(k1, (N, S, H), dtype=jnp.float32)
    question_pooled = jax.random.normal(k2, (1, H), dtype=jnp.float32)

    sim = model_forward(context_token_embeds, question_pooled)
    sim = jax.block_until_ready(sim)

    # Reference check against plain JAX.
    e_c = context_token_embeds[:, 0, :].reshape(1, N, H)
    ref = jnp.matmul(e_c, question_pooled.T).squeeze(-1)
    assert sim.shape == (1, N), sim.shape
    assert jnp.allclose(sim, ref, atol=1e-5, rtol=1e-5)

    print("KERNEL_OK")
</pallas_src>

<mosaic_0001>
module attributes {stable_mosaic.version = 11 : i64} {
  func.func @_sim_kernel(%arg0: i32, %arg1: memref<1x128xf32, #tpu.memory_space<vmem>>, %arg2: memref<8x128xf32, #tpu.memory_space<vmem>>, %arg3: memref<1x8xf32, #tpu.memory_space<vmem>>) attributes {dimension_semantics = [#tpu.dimension_semantics<parallel>], iteration_bounds = array<i64: 1>, scalar_prefetch = 0 : i64, scratch_operands = 0 : i64, tpu.core_type = #tpu.core_type<tc>, window_params = [{pipeline_mode = #tpu.pipeline_mode<synchronous>, transform_indices = @transform_0, window_bounds = array<i64: 1, 128>}, {transform_indices = @transform_1, window_bounds = array<i64: 8, 128>}, {transform_indices = @transform_2, window_bounds = array<i64: 1, 8>}]} {
    %c0 = arith.constant 0 : index
    %c0_0 = arith.constant 0 : index
    %0 = vector.load %arg1[%c0, %c0_0] : memref<1x128xf32, #tpu.memory_space<vmem>>, vector<1x128xf32>
    %c0_1 = arith.constant 0 : index
    %c0_2 = arith.constant 0 : index
    %1 = vector.load %arg2[%c0_1, %c0_2] : memref<8x128xf32, #tpu.memory_space<vmem>>, vector<8x128xf32>
    %cst = arith.constant dense<0.000000e+00> : vector<1x8xf32>
    %2 = tpu.matmul %0, %1, %cst {dimension_numbers = #tpu.dot_dimension_numbers<[1], [1], [0], [0], [0, 0, 1, 0], [], []>} : vector<1x128xf32>, vector<8x128xf32>, vector<1x8xf32> -> vector<1x8xf32>
    %c0_3 = arith.constant 0 : index
    %c0_4 = arith.constant 0 : index
    %3 = vector.load %arg3[%c0_3, %c0_4] : memref<1x8xf32, #tpu.memory_space<vmem>>, vector<1x8xf32>
    tpu.vector_store %arg3[%c0_3, %c0_4], %2 {strides = array<i32>} : memref<1x8xf32, #tpu.memory_space<vmem>>, vector<1x8xf32>,
    return
  }
  func.func @transform_0(%arg0: i32) -> (i32, i32) {
    %c0_i32 = arith.constant 0 : i32
    %c0_i32_0 = arith.constant 0 : i32
    %c0_i32_1 = arith.constant 0 : i32
    return %c0_i32, %c0_i32_0 : i32, i32
  }
  func.func @transform_1(%arg0: i32) -> (i32, i32) {
    %c0_i32 = arith.constant 0 : i32
    %c0_i32_0 = arith.constant 0 : i32
    return %arg0, %c0_i32 : i32, i32
  }
  func.func @transform_2(%arg0: i32) -> (i32, i32) {
    %c0_i32 = arith.constant 0 : i32
    %c0_i32_0 = arith.constant 0 : i32
    return %c0_i32, %arg0 : i32, i32
  }
}

</mosaic_0001>

<llo_original>
// kernel: tpu_custom_call.1
$region0: #{tpu_custom_call.1}
  #allocation0 [shape = 'u32[]', space=smem, size = 0x4, offset = 0x4, fixed_abs, tag = 'smem constant byte address 0x4 - core index']
  #allocation1 [shape = 'u32[144,128]{1,0:T(1,128)}', space=vmem, size = 0x12000, scoped, tag = 'internal scratch']
  %s0 = inlined_call_operand.hbm [shape: f32[1,128], index: 0, kind: input, shape index: {}]
  %s1 = inlined_call_operand.hbm [shape: f32[8,2048], index: 1, kind: input, shape index: {}]
  %s2 = inlined_call_operand.hbm [shape: f32[1,8], index: 2, kind: output, shape index: {}]
  %s3 = sld [smem:[#allocation0]]
  $region26: #{tpu_custom_call.1} parent=0
    _
  %s5 = ssub.s32 1, %s3
  %s6 = scalar_select 0, %s5, %s3
  $region1: #{tpu_custom_call.1} parent=0
    #allocation2 [shape = 'u8[512]{0}', space=vmem, size = 0x400, scoped, tag = 'input window, operand 0, single buffered']
    #allocation3 [shape = 's32[1]{0}', space=sflag, size = 0x4, scoped, tag = 'scoped memory for tpu_custom_call.1']
    #allocation4 [shape = 's32[1]{0}', space=sflag, size = 0x4, scoped, tag = 'scoped memory for tpu_custom_call.1']
    #allocation5 [shape = 'u8[4096]{0}', space=vmem, size = 0x1000, scoped, tag = 'input window, operand 1, single buffered']
    #allocation6 [shape = 's32[1]{0}', space=sflag, size = 0x4, scoped, tag = 'scoped memory for tpu_custom_call.1']
    #allocation7 [shape = 'u8[512]{0}', space=vmem, size = 0x400, scoped, tag = 'output window, operand 0, single buffered']
    %7 = vsyncpa [#allocation3], 0
    %8 = vsyncpa [#allocation6], 0
    %9 = vsyncpa [#allocation4], 0
    // Predicated region
    $region2: #{tpu_custom_call.1} parent=1 // pred_check
      _
    $region3: #{tpu_custom_call.1} parent=1 // pred_check_branch
      %11 = sbr.rel (0) target = $region5
    $region4: #{tpu_custom_call.1} parent=1 // pred_region
      %s13 = ssub.s32 16, 16
      %14 = vsyncadd [#allocation3], %s13
      %s16 = sshll.u32 [#allocation2], 4
      %s17 = int_to_ptr.vmem [resolvable:$true] %s16
      %19 = dma.hbm_to_vmem [thread:$0]  %s0, 16, %s17, [#allocation3]
    $region5: #{tpu_custom_call.1} parent=1 // pred_fallthru
      _
    // Predicated region
    $region6: #{tpu_custom_call.1} parent=1 // pred_check
      _
    $region7: #{tpu_custom_call.1} parent=1 // pred_check_branch
      %21 = sbr.rel (0) target = $region9
    $region8: #{tpu_custom_call.1} parent=1 // pred_region
      %s23 = ssub.s32 128, 128
      %24 = vsyncadd [#allocation6], %s23
      %s26 = sshll.u32 [#allocation5], 4
      %s27 = int_to_ptr.vmem [resolvable:$true] %s26
      %29 = dma.hbm_to_vmem [thread:$0]  %s1, 128, %s27, [#allocation6]
    $region9: #{tpu_custom_call.1} parent=1 // pred_fallthru
      _
    // Predicated region
    $region10: #{tpu_custom_call.1} parent=1 // pred_check
      _
    $region11: #{tpu_custom_call.1} parent=1 // pred_check_branch
      %31 = sbr.rel (0) target = $region13
    $region12: #{tpu_custom_call.1} parent=1 // pred_region
      %32 = dma.done [#allocation3], 16
    $region13: #{tpu_custom_call.1} parent=1 // pred_fallthru
      _
    // Predicated region
    $region14: #{tpu_custom_call.1} parent=1 // pred_check
      _
    $region15: #{tpu_custom_call.1} parent=1 // pred_check_branch
      %34 = sbr.rel (0) target = $region17
    $region16: #{tpu_custom_call.1} parent=1 // pred_region
      %35 = dma.done [#allocation6], 128
    $region17: #{tpu_custom_call.1} parent=1 // pred_fallthru
      _
    %v36 = vld [vmem:[#allocation2] sm:$0x1]
    %v37 = vld [vmem:[#allocation5] sm:$0xff]
    %38 = vmatprep.subr.mxu0 0.0
    %39 = vmatpush1.xpose.msra.mxu0 %v37
    %40 = vmatprep.subr.mxu0 0.0
    %41 = vmatpush1.xpose.msra.mxu0 0.0
    %42 = vmatprep.subr.mxu0 0.0
    %43 = vmatpush1.xpose.msra.mxu0 0.0
    %44 = vmatprep.subr.mxu0 0.0
    %45 = vmatpush1.xpose.msra.mxu0 0.0
    %46 = vmatprep.subr.mxu0 0.0
    %47 = vmatpush1.xpose.msra.mxu0 0.0
    %48 = vmatprep.subr.mxu0 0.0
    %49 = vmatpush1.xpose.msra.mxu0 0.0
    %50 = vmatprep.subr.mxu0 0.0
    %51 = vmatpush1.xpose.msra.mxu0 0.0
    %52 = vmatprep.subr.mxu0 0.0
    %53 = vmatpush1.xpose.msra.mxu0 0.0
    %54 = vmatprep.subr.mxu0 0.0
    %55 = vmatpush1.xpose.msra.mxu0 0.0
    %56 = vmatprep.subr.mxu0 0.0
    %57 = vmatpush1.xpose.msra.mxu0 0.0
    %58 = vmatprep.subr.mxu0 0.0
    %59 = vmatpush1.xpose.msra.mxu0 0.0
    %60 = vmatprep.subr.mxu0 0.0
    %61 = vmatpush1.xpose.msra.mxu0 0.0
    %62 = vmatprep.subr.mxu0 0.0
    %63 = vmatpush1.xpose.msra.mxu0 0.0
    %64 = vmatprep.subr.mxu0 0.0
    %65 = vmatpush1.xpose.msra.mxu0 0.0
    %66 = vmatprep.subr.mxu0 0.0
    %67 = vmatpush1.xpose.msra.mxu0 0.0
    %68 = vmatprep.subr.mxu0 0.0
    %69 = vmatpush1.xpose.msra.mxu0 0.0
    %70 = vmatprep.subr.mxu0 0.0
    %71 = vmatpush1.xpose.msra.mxu0 0.0
    %72 = vmatprep.subr.mxu0 0.0
    %73 = vmatpush1.xpose.msra.mxu0 0.0
    %74 = vmatprep.subr.mxu0 0.0
    %75 = vmatpush1.xpose.msra.mxu0 0.0
    %76 = vmatprep.subr.mxu0 0.0
    %77 = vmatpush1.xpose.msra.mxu0 0.0
    %78 = vmatprep.subr.mxu0 0.0
    %79 = vmatpush1.xpose.msra.mxu0 0.0
    %80 = vmatprep.subr.mxu0 0.0
    %81 = vmatpush1.xpose.msra.mxu0 0.0
    %82 = vmatprep.subr.mxu0 0.0
    %83 = vmatpush1.xpose.msra.mxu0 0.0
    %84 = vmatprep.subr.mxu0 0.0
    %85 = vmatpush1.xpose.msra.mxu0 0.0
    %86 = vmatprep.subr.mxu0 0.0
    %87 = vmatpush1.xpose.msra.mxu0 0.0
    %88 = vmatprep.subr.mxu0 0.0
    %89 = vmatpush1.xpose.msra.mxu0 0.0
    %90 = vmatprep.subr.mxu0 0.0
    %91 = vmatpush1.xpose.msra.mxu0 0.0
    %92 = vmatprep.subr.mxu0 0.0
    %93 = vmatpush1.xpose.msra.mxu0 0.0
    %94 = vmatprep.subr.mxu0 0.0
    %95 = vmatpush1.xpose.msra.mxu0 0.0
    %96 = vmatprep.subr.mxu0 0.0
    %97 = vmatpush1.xpose.msra.mxu0 0.0
    %98 = vmatprep.subr.mxu0 0.0
    %99 = vmatpush1.xpose.msra.mxu0 0.0
    %100 = vmatprep.subr.mxu0 0.0
    %101 = vmatpush1.xpose.msra.mxu0 0.0
    %102 = vmatprep.mubr.f32.mxu0 0.0
    %103 = vmatmul.mubr.f32.gmra.mrb[0].mxu0 %v36
    %v104 = vpop.f32.mrb[0].mxu0
    %v105 = vadd.f32 0.0, %v104
    %v106 = vpop.f32.mrb[0].mxu0
    %107 = vdwg.mxu0
    %vm108 = vcmask 57344
    %109 = vst.msk [vmem:[#allocation7] sm:$0x1] %vm108, %v105
    // Predicated region
    $region18: #{tpu_custom_call.1} parent=1 // pred_check
      _
    $region19: #{tpu_custom_call.1} parent=1 // pred_check_branch
      %111 = sbr.rel (0) target = $region21
    $region20: #{tpu_custom_call.1} parent=1 // pred_region
      %s113 = ssub.s32 16, 16
      %114 = vsyncadd [#allocation4], %s113
      %s116 = sshll.u32 [#allocation7], 4
      %s117 = int_to_ptr.vmem [resolvable:$true] %s116
      %119 = dma.vmem_to_hbm [thread:$0]  %s117, 16, %s2, [#allocation4]
    $region21: #{tpu_custom_call.1} parent=1 // pred_fallthru
      _
    // Predicated region
    $region22: #{tpu_custom_call.1} parent=1 // pred_check
      _
    $region23: #{tpu_custom_call.1} parent=1 // pred_check_branch
      %121 = sbr.rel (0) target = $region25
    $region24: #{tpu_custom_call.1} parent=1 // pred_region
      %122 = dma.done [#allocation4], 16
    $region25: #{tpu_custom_call.1} parent=1 // pred_fallthru
      _
    %123 = vsyncpa [#allocation3], 1
    %124 = vsyncpa [#allocation6], 1
    %125 = vsyncpa [#allocation4], 1

</llo_original>
